<compile_context>
chip_gen: v7x
topology: tpu7x:2x2x1
jax: 0.10.0
libtpu: 0.0.40
codegen_flags: <defaults>
</compile_context>

<pallas_src>
import functools

import jax
import jax.numpy as jnp
from jax.experimental import pallas as pl
from jax.experimental.pallas import tpu as pltpu

HIDDEN1, HIDDEN2 = 30, 20


def _round_up(x, m):
    return (x + m - 1) // m * m


def mlp_kernel(x_ref, w1_ref, b1_ref, w2_ref, b2_ref, w3_ref, b3_ref, o_ref):
    # x tile: (TB, num_inputs) bf16; weights bf16 (in, out); biases f32 (1, out).
    x = x_ref[...]

    h1 = jnp.dot(x, w1_ref[...], preferred_element_type=jnp.float32) + b1_ref[...]
    h1 = jnp.maximum(h1, 0.0).astype(jnp.bfloat16)

    h2 = jnp.dot(h1, w2_ref[...], preferred_element_type=jnp.float32) + b2_ref[...]
    h2 = jnp.maximum(h2, 0.0).astype(jnp.bfloat16)

    logits = jnp.dot(h2, w3_ref[...], preferred_element_type=jnp.float32) + b3_ref[...]
    o_ref[...] = logits.astype(o_ref.dtype)


def prepare_params(params):
    """One-time glue: transpose weights to (in, out) bf16, biases to (1, out) f32."""
    (w1, b1), (w2, b2), (w3, b3) = params["l1"], params["l2"], params["l3"]
    return (
        jnp.asarray(w1.T, jnp.bfloat16), jnp.asarray(b1, jnp.float32)[None, :],
        jnp.asarray(w2.T, jnp.bfloat16), jnp.asarray(b2, jnp.float32)[None, :],
        jnp.asarray(w3.T, jnp.bfloat16), jnp.asarray(b3, jnp.float32)[None, :],
    )


@functools.partial(jax.jit, static_argnames=("tile_b",))
def neural_network_forward(x, prepared, *, tile_b=1024):
    """x: (B, num_inputs) float32. prepared: output of prepare_params()."""
    w1t, b1r, w2t, b2r, w3t, b3r = prepared
    B, num_inputs = x.shape
    num_outputs = w3t.shape[1]

    # bf16 input halves HBM traffic of the dominant stream; accumulation is f32.
    xb = x.astype(jnp.bfloat16)

    # Pick a batch tile (multiple of 16 for bf16 sublane packing) and pad B to it.
    tb = min(tile_b, _round_up(B, 16))
    b_pad = _round_up(B, tb)
    if b_pad != B:
        xb = jnp.pad(xb, ((0, b_pad - B), (0, 0)))
    grid = (b_pad // tb,)

    def batch_spec(shape):
        return pl.BlockSpec(shape, lambda i: (i, 0))

    def const_spec(shape):
        return pl.BlockSpec(shape, lambda i: (0, 0))

    flops = 2 * b_pad * (num_inputs * HIDDEN1 + HIDDEN1 * HIDDEN2 + HIDDEN2 * num_outputs)
    bytes_accessed = (
        xb.size * xb.dtype.itemsize
        + b_pad * num_outputs * 4
        + sum(a.size * a.dtype.itemsize for a in (w1t, b1r, w2t, b2r, w3t, b3r))
    )

    out = pl.pallas_call(
        mlp_kernel,
        out_shape=jax.ShapeDtypeStruct((b_pad, num_outputs), jnp.float32),
        grid=grid,
        in_specs=[
            batch_spec((tb, num_inputs)),
            const_spec(w1t.shape), const_spec(b1r.shape),
            const_spec(w2t.shape), const_spec(b2r.shape),
            const_spec(w3t.shape), const_spec(b3r.shape),
        ],
        # TODO(synk): optionally emit an NT (num_outputs, TB) lane-dense output to
        # avoid masked vst on the 4-wide last dim; negligible here with large TB.
        out_specs=batch_spec((tb, num_outputs)),
        compiler_params=pltpu.CompilerParams(
            dimension_semantics=("parallel",),
        ),
        cost_estimate=pl.CostEstimate(
            flops=flops, transcendentals=0, bytes_accessed=bytes_accessed),
    )(xb, w1t, b1r, w2t, b2r, w3t, b3r)

    return out[:B]


def init_params(key, num_inputs, num_outputs):
    """Deterministic init mimicking torch.nn.Linear default (uniform +-1/sqrt(fan_in))."""
    def linear(key, fan_in, fan_out):
        kw, kb = jax.random.split(key)
        bound = 1.0 / jnp.sqrt(fan_in)
        w = jax.random.uniform(kw, (fan_out, fan_in), jnp.float32, -bound, bound)
        b = jax.random.uniform(kb, (fan_out,), jnp.float32, -bound, bound)
        return w, b

    k1, k2, k3 = jax.random.split(key, 3)
    return {
        "l1": linear(k1, num_inputs, HIDDEN1),
        "l2": linear(k2, HIDDEN1, HIDDEN2),
        "l3": linear(k3, HIDDEN2, num_outputs),
    }


def reference_forward_f32(x, params):
    (w1, b1), (w2, b2), (w3, b3) = params["l1"], params["l2"], params["l3"]
    h1 = jnp.maximum(x @ w1.T + b1, 0.0)
    h2 = jnp.maximum(h1 @ w2.T + b2, 0.0)
    return h2 @ w3.T + b3


def reference_forward_bf16(x, prepared):
    """Pure-JAX reference with the same precision pipeline as the kernel."""
    w1t, b1r, w2t, b2r, w3t, b3r = prepared
    xb = x.astype(jnp.bfloat16)
    h1 = jnp.maximum(jnp.dot(xb, w1t, preferred_element_type=jnp.float32) + b1r, 0.0)
    h1 = h1.astype(jnp.bfloat16)
    h2 = jnp.maximum(jnp.dot(h1, w2t, preferred_element_type=jnp.float32) + b2r, 0.0)
    h2 = h2.astype(jnp.bfloat16)
    return jnp.dot(h2, w3t, preferred_element_type=jnp.float32) + b3r


if __name__ == "__main__":
    num_inputs, num_outputs = 32, 4
    batch = 8

    key = jax.random.PRNGKey(0)
    kx, kp = jax.random.split(key)
    x = jax.random.normal(kx, (batch, num_inputs), jnp.float32)
    params = init_params(kp, num_inputs, num_outputs)
    prepared = prepare_params(params)

    logits = neural_network_forward(x, prepared)
    jax.block_until_ready(logits)

    assert logits.shape == (batch, num_outputs)

    # Exact-precision reference (same bf16 inputs / f32 accumulation as the kernel).
    ref_bf16 = reference_forward_bf16(x, prepared)
    assert jnp.allclose(logits, ref_bf16, atol=1e-2, rtol=1e-2), \
        "mismatch vs. bf16-matched JAX reference"

    # Sanity check vs. the original f32 module semantics (loose tol for bf16 inputs).
    ref_f32 = reference_forward_f32(x, params)
    assert jnp.allclose(logits, ref_f32, atol=1e-1, rtol=1e-1), \
        "mismatch vs. f32 module reference"

    print("KERNEL_OK")
</pallas_src>

<mosaic_0001>
module attributes {stable_mosaic.version = 11 : i64} {
  func.func @mlp_kernel(%arg0: i32, %arg1: memref<16x32xbf16, #tpu.memory_space<vmem>>, %arg2: memref<32x30xbf16, #tpu.memory_space<vmem>>, %arg3: memref<1x30xf32, #tpu.memory_space<vmem>>, %arg4: memref<30x20xbf16, #tpu.memory_space<vmem>>, %arg5: memref<1x20xf32, #tpu.memory_space<vmem>>, %arg6: memref<20x4xbf16, #tpu.memory_space<vmem>>, %arg7: memref<1x4xf32, #tpu.memory_space<vmem>>, %arg8: memref<16x4xf32, #tpu.memory_space<vmem>>) attributes {dimension_semantics = [#tpu.dimension_semantics<parallel>], iteration_bounds = array<i64: 1>, scalar_prefetch = 0 : i64, scratch_operands = 0 : i64, tpu.core_type = #tpu.core_type<tc>, window_params = [{transform_indices = @transform_0, window_bounds = array<i64: 16, 32>}, {pipeline_mode = #tpu.pipeline_mode<synchronous>, transform_indices = @transform_1, window_bounds = array<i64: 32, 30>}, {pipeline_mode = #tpu.pipeline_mode<synchronous>, transform_indices = @transform_2, window_bounds = array<i64: 1, 30>}, {pipeline_mode = #tpu.pipeline_mode<synchronous>, transform_indices = @transform_3, window_bounds = array<i64: 30, 20>}, {pipeline_mode = #tpu.pipeline_mode<synchronous>, transform_indices = @transform_4, window_bounds = array<i64: 1, 20>}, {pipeline_mode = #tpu.pipeline_mode<synchronous>, transform_indices = @transform_5, window_bounds = array<i64: 20, 4>}, {pipeline_mode = #tpu.pipeline_mode<synchronous>, transform_indices = @transform_6, window_bounds = array<i64: 1, 4>}, {transform_indices = @transform_7, window_bounds = array<i64: 16, 4>}]} {
    %c0 = arith.constant 0 : index
    %c0_0 = arith.constant 0 : index
    %0 = vector.load %arg1[%c0, %c0_0] : memref<16x32xbf16, #tpu.memory_space<vmem>>, vector<16x32xbf16>
    %c0_1 = arith.constant 0 : index
    %c0_2 = arith.constant 0 : index
    %1 = vector.load %arg2[%c0_1, %c0_2] : memref<32x30xbf16, #tpu.memory_space<vmem>>, vector<32x30xbf16>
    %cst = arith.constant dense<0.000000e+00> : vector<16x30xf32>
    %2 = tpu.matmul %0, %1, %cst {dimension_numbers = #tpu.dot_dimension_numbers<[1], [0], [0], [1], [0, 0, 1, 1], [], []>} : vector<16x32xbf16>, vector<32x30xbf16>, vector<16x30xf32> -> vector<16x30xf32>
    %c0_3 = arith.constant 0 : index
    %c0_4 = arith.constant 0 : index
    %3 = vector.load %arg3[%c0_3, %c0_4] : memref<1x30xf32, #tpu.memory_space<vmem>>, vector<1x30xf32>
    %4 = vector.broadcast %3 : vector<1x30xf32> to vector<16x30xf32>
    %5 = arith.addf %2, %4 : vector<16x30xf32>
    %cst_5 = arith.constant 0.000000e+00 : f32
    %6 = vector.broadcast %cst_5 : f32 to vector<16x30xf32>
    %7 = arith.maximumf %5, %6 : vector<16x30xf32>
    %8 = arith.truncf %7 : vector<16x30xf32> to vector<16x30xbf16>
    %c0_6 = arith.constant 0 : index
    %c0_7 = arith.constant 0 : index
    %9 = vector.load %arg4[%c0_6, %c0_7] : memref<30x20xbf16, #tpu.memory_space<vmem>>, vector<30x20xbf16>
    %cst_8 = arith.constant dense<0.000000e+00> : vector<16x20xf32>
    %10 = tpu.matmul %8, %9, %cst_8 {dimension_numbers = #tpu.dot_dimension_numbers<[1], [0], [0], [1], [0, 0, 1, 1], [], []>} : vector<16x30xbf16>, vector<30x20xbf16>, vector<16x20xf32> -> vector<16x20xf32>
    %c0_9 = arith.constant 0 : index
    %c0_10 = arith.constant 0 : index
    %11 = vector.load %arg5[%c0_9, %c0_10] : memref<1x20xf32, #tpu.memory_space<vmem>>, vector<1x20xf32>
    %12 = vector.broadcast %11 : vector<1x20xf32> to vector<16x20xf32>
    %13 = arith.addf %10, %12 : vector<16x20xf32>
    %cst_11 = arith.constant 0.000000e+00 : f32
    %14 = vector.broadcast %cst_11 : f32 to vector<16x20xf32>
    %15 = arith.maximumf %13, %14 : vector<16x20xf32>
    %16 = arith.truncf %15 : vector<16x20xf32> to vector<16x20xbf16>
    %c0_12 = arith.constant 0 : index
    %c0_13 = arith.constant 0 : index
    %17 = vector.load %arg6[%c0_12, %c0_13] : memref<20x4xbf16, #tpu.memory_space<vmem>>, vector<20x4xbf16>
    %cst_14 = arith.constant dense<0.000000e+00> : vector<16x4xf32>
    %18 = tpu.matmul %16, %17, %cst_14 {dimension_numbers = #tpu.dot_dimension_numbers<[1], [0], [0], [1], [0, 0, 1, 1], [], []>} : vector<16x20xbf16>, vector<20x4xbf16>, vector<16x4xf32> -> vector<16x4xf32>
    %c0_15 = arith.constant 0 : index
    %c0_16 = arith.constant 0 : index
    %19 = vector.load %arg7[%c0_15, %c0_16] : memref<1x4xf32, #tpu.memory_space<vmem>>, vector<1x4xf32>
    %20 = vector.broadcast %19 : vector<1x4xf32> to vector<16x4xf32>
    %21 = arith.addf %18, %20 : vector<16x4xf32>
    %c0_17 = arith.constant 0 : index
    %c0_18 = arith.constant 0 : index
    %22 = vector.load %arg8[%c0_17, %c0_18] : memref<16x4xf32, #tpu.memory_space<vmem>>, vector<16x4xf32>
    tpu.vector_store %arg8[%c0_17, %c0_18], %21 {strides = array<i32>} : memref<16x4xf32, #tpu.memory_space<vmem>>, vector<16x4xf32>,
    return
  }
  func.func @transform_0(%arg0: i32) -> (i32, i32) {
    %c0_i32 = arith.constant 0 : i32
    %c0_i32_0 = arith.constant 0 : i32
    return %arg0, %c0_i32 : i32, i32
  }
  func.func @transform_1(%arg0: i32) -> (i32, i32) {
    %c0_i32 = arith.constant 0 : i32
    %c0_i32_0 = arith.constant 0 : i32
    %c0_i32_1 = arith.constant 0 : i32
    return %c0_i32, %c0_i32_0 : i32, i32
  }
  func.func @transform_2(%arg0: i32) -> (i32, i32) {
    %c0_i32 = arith.constant 0 : i32
    %c0_i32_0 = arith.constant 0 : i32
    %c0_i32_1 = arith.constant 0 : i32
    return %c0_i32, %c0_i32_0 : i32, i32
  }
  func.func @transform_3(%arg0: i32) -> (i32, i32) {
    %c0_i32 = arith.constant 0 : i32
    %c0_i32_0 = arith.constant 0 : i32
    %c0_i32_1 = arith.constant 0 : i32
    return %c0_i32, %c0_i32_0 : i32, i32
  }
  func.func @transform_4(%arg0: i32) -> (i32, i32) {
    %c0_i32 = arith.constant 0 : i32
    %c0_i32_0 = arith.constant 0 : i32
    %c0_i32_1 = arith.constant 0 : i32
    return %c0_i32, %c0_i32_0 : i32, i32
  }
  func.func @transform_5(%arg0: i32) -> (i32, i32) {
    %c0_i32 = arith.constant 0 : i32
    %c0_i32_0 = arith.constant 0 : i32
    %c0_i32_1 = arith.constant 0 : i32
    return %c0_i32, %c0_i32_0 : i32, i32
  }
  func.func @transform_6(%arg0: i32) -> (i32, i32) {
    %c0_i32 = arith.constant 0 : i32
    %c0_i32_0 = arith.constant 0 : i32
    %c0_i32_1 = arith.constant 0 : i32
    return %c0_i32, %c0_i32_0 : i32, i32
  }
  func.func @transform_7(%arg0: i32) -> (i32, i32) {
    %c0_i32 = arith.constant 0 : i32
    %c0_i32_0 = arith.constant 0 : i32
    return %arg0, %c0_i32 : i32, i32
  }
}

</mosaic_0001>

<llo_original>
// kernel: neural_network_forward.1
$region0: #{neural_network_forward.1}
  #allocation0 [shape = 'u32[]', space=smem, size = 0x4, offset = 0x4, fixed_abs, tag = 'smem constant byte address 0x4 - core index']
  #allocation1 [shape = 'u32[144,128]{1,0:T(1,128)}', space=vmem, size = 0x12000, scoped, tag = 'internal scratch']
  %s0 = inlined_call_operand.vmem [shape: bf16[16,32], index: 0, kind: input, shape index: {}]
  %s1 = inlined_call_operand.vmem [shape: bf16[32,30], index: 1, kind: input, shape index: {}]
  %s2 = inlined_call_operand.vmem [shape: f32[1,30], index: 2, kind: input, shape index: {}]
  %s3 = inlined_call_operand.vmem [shape: bf16[30,20], index: 3, kind: input, shape index: {}]
  %s4 = inlined_call_operand.vmem [shape: f32[1,20], index: 4, kind: input, shape index: {}]
  %s5 = inlined_call_operand.vmem [shape: bf16[20,4], index: 5, kind: input, shape index: {}]
  %s6 = inlined_call_operand.vmem [shape: f32[1,4], index: 6, kind: input, shape index: {}]
  %s7 = inlined_call_operand.vmem [shape: f32[16,4], index: 7, kind: output, shape index: {}]
  %s8 = sld [smem:[#allocation0]]
  $region38: #{neural_network_forward.1} parent=0
    _
  %s10 = ssub.s32 1, %s8
  %s11 = scalar_select 0, %s10, %s8
  // Predicated region
  $region2: #{neural_network_forward.1} parent=0 // pred_check
    _
  $region3: #{neural_network_forward.1} parent=0 // pred_check_branch
    %13 = sbr.rel (0) target = $region5
  $region4: #{neural_network_forward.1} parent=0 // pred_region
    _
  $region5: #{neural_network_forward.1} parent=0 // pred_fallthru
    _
  // Predicated region
  $region6: #{neural_network_forward.1} parent=0 // pred_check
    _
  $region7: #{neural_network_forward.1} parent=0 // pred_check_branch
    %15 = sbr.rel (0) target = $region9
  $region8: #{neural_network_forward.1} parent=0 // pred_region
    _
  $region9: #{neural_network_forward.1} parent=0 // pred_fallthru
    _
  // Predicated region
  $region10: #{neural_network_forward.1} parent=0 // pred_check
    _
  $region11: #{neural_network_forward.1} parent=0 // pred_check_branch
    %17 = sbr.rel (0) target = $region13
  $region12: #{neural_network_forward.1} parent=0 // pred_region
    _
  $region13: #{neural_network_forward.1} parent=0 // pred_fallthru
    _
  // Predicated region
  $region14: #{neural_network_forward.1} parent=0 // pred_check
    _
  $region15: #{neural_network_forward.1} parent=0 // pred_check_branch
    %19 = sbr.rel (0) target = $region17
  $region16: #{neural_network_forward.1} parent=0 // pred_region
    _
  $region17: #{neural_network_forward.1} parent=0 // pred_fallthru
    _
  // Predicated region
  $region18: #{neural_network_forward.1} parent=0 // pred_check
    _
  $region19: #{neural_network_forward.1} parent=0 // pred_check_branch
    %21 = sbr.rel (0) target = $region21
  $region20: #{neural_network_forward.1} parent=0 // pred_region
    _
  $region21: #{neural_network_forward.1} parent=0 // pred_fallthru
    _
  // Predicated region
  $region22: #{neural_network_forward.1} parent=0 // pred_check
    _
  $region23: #{neural_network_forward.1} parent=0 // pred_check_branch
    %23 = sbr.rel (0) target = $region25
  $region24: #{neural_network_forward.1} parent=0 // pred_region
    _
  $region25: #{neural_network_forward.1} parent=0 // pred_fallthru
    _
  // Predicated region
  $region26: #{neural_network_forward.1} parent=0 // pred_check
    _
  $region27: #{neural_network_forward.1} parent=0 // pred_check_branch
    %25 = sbr.rel (0) target = $region29
  $region28: #{neural_network_forward.1} parent=0 // pred_region
    _
  $region29: #{neural_network_forward.1} parent=0 // pred_fallthru
    _
  %v27 = vld [vmem:[%s0] sm:$0xf]
  %v28 = vld [vmem:[%s0 + $0x4] sm:$0xf]
  %v29 = vld [vmem:[%s1] sm:$0xf]
  %v30 = vld [vmem:[%s1 + $0x4] sm:$0xf]
  %v31 = vld [vmem:[%s1 + $0x8] sm:$0xf]
  %v32 = vld [vmem:[%s1 + $0xc] sm:$0xf]
  %v33 = vld [vmem:[%s2] sm:$0x1]
  %v35 = vlaneseq
  %v36 = vshrl.u32 %v35, 7
  %v37 = vsub.s32 0, %v36
  %v38 = vrot.slane %v33, %v37
  %v42 = vunpack.c.l.b16 %v27
  %v43 = vunpack.c.l.b16 %v28
  %v44 = vpack.c.b16 %v43, %v42
  %v49 = vunpack.c.l.b16 %v29
  %v50 = vunpack.c.l.b16 %v30
  %v51 = vunpack.c.l.b16 %v31
  %v52 = vunpack.c.l.b16 %v32
  %v53 = vpack.c.b16 %v50, %v49
  %v54 = vpack.c.b16 %v52, %v51
  %vm57 = vcmask 261120
  %v59 = vsel %vm57, %v44, 0
  %61 = vmatprep.subr.bf16.mxu0 0
  %62 = vmatpush1.bf16.msra.mxu0 %v53
  %63 = vmatprep.subr.bf16.mxu0 0
  %64 = vmatpush1.bf16.msra.mxu0 %v54
  %65 = vmatprep.subr.bf16.mxu0 0
  %66 = vmatpush1.bf16.msra.mxu0 0
  %67 = vmatprep.subr.bf16.mxu0 0
  %68 = vmatpush1.bf16.msra.mxu0 0
  %69 = vmatprep.subr.bf16.mxu0 0
  %70 = vmatpush1.bf16.msra.mxu0 0
  %71 = vmatprep.subr.bf16.mxu0 0
  %72 = vmatpush1.bf16.msra.mxu0 0
  %73 = vmatprep.subr.bf16.mxu0 0
  %74 = vmatpush1.bf16.msra.mxu0 0
  %75 = vmatprep.subr.bf16.mxu0 0
  %76 = vmatpush1.bf16.msra.mxu0 0
  %77 = vmatprep.subr.bf16.mxu0 0
  %78 = vmatpush1.bf16.msra.mxu0 0
  %79 = vmatprep.subr.bf16.mxu0 0
  %80 = vmatpush1.bf16.msra.mxu0 0
  %81 = vmatprep.subr.bf16.mxu0 0
  %82 = vmatpush1.bf16.msra.mxu0 0
  %83 = vmatprep.subr.bf16.mxu0 0
  %84 = vmatpush1.bf16.msra.mxu0 0
  %85 = vmatprep.subr.bf16.mxu0 0
  %86 = vmatpush1.bf16.msra.mxu0 0
  %87 = vmatprep.subr.bf16.mxu0 0
  %88 = vmatpush1.bf16.msra.mxu0 0
  %89 = vmatprep.subr.bf16.mxu0 0
  %90 = vmatpush1.bf16.msra.mxu0 0
  %91 = vmatprep.subr.bf16.mxu0 0
  %92 = vmatpush1.bf16.msra.mxu0 0
  %93 = vmatprep.mubr.bf16.mxu0 0
  %94 = vmatmul.mubr.bf16.gmra.mrb[0].mxu0 %v59
  %v95 = vpop.f32.mrb[0].mxu0
  %v96 = vadd.f32 %v38, %v95
  %v97 = vpop.f32.mrb[0].mxu0
  %v98 = vpop.f32.mrb[0].mxu0
  %v99 = vadd.f32 %v38, %v98
  %v100 = vpop.f32.mrb[0].mxu0
  %101 = vdwg.mxu0
  %v102 = vmax.f32 %v96, 0.0
  %v103 = vmax.f32 %v99, 0.0
  %v104 = vpack.c.bf16 %v103, %v102
  %v105 = vld [vmem:[%s3] sm:$0xf]
  %v106 = vld [vmem:[%s3 + $0x4] sm:$0xf]
  %v107 = vld [vmem:[%s3 + $0x8] sm:$0xf]
  %v108 = vld [vmem:[%s3 + $0xc] sm:$0x7]
  %v109 = vld [vmem:[%s4] sm:$0x1]
  %v111 = vlaneseq
  %v112 = vshrl.u32 %v111, 7
  %v113 = vsub.s32 0, %v112
  %v114 = vrot.slane %v109, %v113
  %v120 = vunpack.c.l.b16 %v105
  %v121 = vunpack.c.l.b16 %v106
  %v122 = vunpack.c.l.b16 %v107
  %v123 = vunpack.c.l.b16 %v108
  %v124 = vpack.c.b16 %v121, %v120
  %v125 = vpack.c.b16 %v123, %v122
  %vm127 = vcmask 244736
  %v129 = vsel %vm127, %v104, 0
  %vm131 = vcmask 1046528
  %v133 = vsel %vm131, %v125, 0
  %135 = vmatprep.subr.bf16.mxu0 0
  %136 = vmatpush1.bf16.msra.mxu0 %v124
  %137 = vmatprep.subr.bf16.mxu0 0
  %138 = vmatpush1.bf16.msra.mxu0 %v133
  %139 = vmatprep.subr.bf16.mxu0 0
  %140 = vmatpush1.bf16.msra.mxu0 0
  %141 = vmatprep.subr.bf16.mxu0 0
  %142 = vmatpush1.bf16.msra.mxu0 0
  %143 = vmatprep.subr.bf16.mxu0 0
  %144 = vmatpush1.bf16.msra.mxu0 0
  %145 = vmatprep.subr.bf16.mxu0 0
  %146 = vmatpush1.bf16.msra.mxu0 0
  %147 = vmatprep.subr.bf16.mxu0 0
  %148 = vmatpush1.bf16.msra.mxu0 0
  %149 = vmatprep.subr.bf16.mxu0 0
  %150 = vmatpush1.bf16.msra.mxu0 0
  %151 = vmatprep.subr.bf16.mxu0 0
  %152 = vmatpush1.bf16.msra.mxu0 0
  %153 = vmatprep.subr.bf16.mxu0 0
  %154 = vmatpush1.bf16.msra.mxu0 0
  %155 = vmatprep.subr.bf16.mxu0 0
  %156 = vmatpush1.bf16.msra.mxu0 0
  %157 = vmatprep.subr.bf16.mxu0 0
  %158 = vmatpush1.bf16.msra.mxu0 0
  %159 = vmatprep.subr.bf16.mxu0 0
  %160 = vmatpush1.bf16.msra.mxu0 0
  %161 = vmatprep.subr.bf16.mxu0 0
  %162 = vmatpush1.bf16.msra.mxu0 0
  %163 = vmatprep.subr.bf16.mxu0 0
  %164 = vmatpush1.bf16.msra.mxu0 0
  %165 = vmatprep.subr.bf16.mxu0 0
  %166 = vmatpush1.bf16.msra.mxu0 0
  %167 = vmatprep.mubr.bf16.mxu0 0
  %168 = vmatmul.mubr.bf16.gmra.mrb[0].mxu0 %v129
  %v169 = vpop.f32.mrb[0].mxu0
  %v170 = vadd.f32 %v114, %v169
  %v171 = vpop.f32.mrb[0].mxu0
  %v172 = vpop.f32.mrb[0].mxu0
  %v173 = vadd.f32 %v114, %v172
  %v174 = vpop.f32.mrb[0].mxu0
  %175 = vdwg.mxu0
  %v176 = vmax.f32 %v170, 0.0
  %v177 = vmax.f32 %v173, 0.0
  %v178 = vpack.c.bf16 %v177, %v176
  %v179 = vld [vmem:[%s5] sm:$0xf]
  %v180 = vld [vmem:[%s5 + $0x4] sm:$0xf]
  %v181 = vld [vmem:[%s5 + $0x8] sm:$0x3]
  %v182 = vld [vmem:[%s6] sm:$0x1]
  %v184 = vlaneseq
  %v185 = vshrl.u32 %v184, 7
  %v186 = vsub.s32 0, %v185
  %v187 = vrot.slane %v182, %v186
  %v192 = vunpack.c.l.b16 %v179
  %v193 = vunpack.c.l.b16 %v180
  %v194 = vunpack.c.l.b16 %v181
  %v195 = vpack.c.b16 %v193, %v192
  %v196 = vpack.c.b16 %v194, %v194
  %vm198 = vcmask 162816
  %v200 = vsel %vm198, %v178, 0
  %vm202 = vcmask 1041408
  %v204 = vsel %vm202, %v196, 0
  %206 = vmatprep.subr.bf16.mxu0 0
  %207 = vmatpush1.bf16.msra.mxu0 %v195
  %208 = vmatprep.subr.bf16.mxu0 0
  %209 = vmatpush1.bf16.msra.mxu0 %v204
  %210 = vmatprep.subr.bf16.mxu0 0
  %211 = vmatpush1.bf16.msra.mxu0 0
  %212 = vmatprep.subr.bf16.mxu0 0
  %213 = vmatpush1.bf16.msra.mxu0 0
  %214 = vmatprep.subr.bf16.mxu0 0
  %215 = vmatpush1.bf16.msra.mxu0 0
  %216 = vmatprep.subr.bf16.mxu0 0
  %217 = vmatpush1.bf16.msra.mxu0 0
  %218 = vmatprep.subr.bf16.mxu0 0
  %219 = vmatpush1.bf16.msra.mxu0 0
  %220 = vmatprep.subr.bf16.mxu0 0
  %221 = vmatpush1.bf16.msra.mxu0 0
  %222 = vmatprep.subr.bf16.mxu0 0
  %223 = vmatpush1.bf16.msra.mxu0 0
  %224 = vmatprep.subr.bf16.mxu0 0
  %225 = vmatpush1.bf16.msra.mxu0 0
  %226 = vmatprep.subr.bf16.mxu0 0
  %227 = vmatpush1.bf16.msra.mxu0 0
  %228 = vmatprep.subr.bf16.mxu0 0
  %229 = vmatpush1.bf16.msra.mxu0 0
  %230 = vmatprep.subr.bf16.mxu0 0
  %231 = vmatpush1.bf16.msra.mxu0 0
  %232 = vmatprep.subr.bf16.mxu0 0
  %233 = vmatpush1.bf16.msra.mxu0 0
  %234 = vmatprep.subr.bf16.mxu0 0
  %235 = vmatpush1.bf16.msra.mxu0 0
  %236 = vmatprep.subr.bf16.mxu0 0
  %237 = vmatpush1.bf16.msra.mxu0 0
  %238 = vmatprep.mubr.bf16.mxu0 0
  %239 = vmatmul.mubr.bf16.gmra.mrb[0].mxu0 %v200
  %v240 = vpop.f32.mrb[0].mxu0
  %v241 = vadd.f32 %v187, %v240
  %v242 = vpop.f32.mrb[0].mxu0
  %v243 = vpop.f32.mrb[0].mxu0
  %v244 = vadd.f32 %v187, %v243
  %v245 = vpop.f32.mrb[0].mxu0
  %246 = vdwg.mxu0
  %vm247 = vcmask 31744
  %248 = vst.msk [vmem:[%s7] sm:$0xff] %vm247, %v241
  %249 = vst.msk [vmem:[%s7 + $0x8] sm:$0xff] %vm247, %v244
  // Predicated region
  $region30: #{neural_network_forward.1} parent=0 // pred_check
    _
  $region31: #{neural_network_forward.1} parent=0 // pred_check_branch
    %251 = sbr.rel (0) target = $region33
  $region32: #{neural_network_forward.1} parent=0 // pred_region
    _
  $region33: #{neural_network_forward.1} parent=0 // pred_fallthru
    _
  // Predicated region
  $region34: #{neural_network_forward.1} parent=0 // pred_check
    _
  $region35: #{neural_network_forward.1} parent=0 // pred_check_branch
    %253 = sbr.rel (0) target = $region37
  $region36: #{neural_network_forward.1} parent=0 // pred_region
    _
  $region37: #{neural_network_forward.1} parent=0 // pred_fallthru
    _

</llo_original>
